<compile_context>
chip_gen: v5e
topology: v5e:2x2
jax: 0.10.0
libtpu: 0.0.40
codegen_flags: <defaults>
</compile_context>

<pallas_src>
import numpy as np
import jax
import jax.numpy as jnp
from jax.experimental import pallas as pl
from jax.experimental.pallas import tpu as pltpu


def _pick_tn(N, W, lane_target=128):
    """Images packed side-by-side along lanes so TN*W reaches the lane target."""
    if W >= lane_target:
        return 1
    return max(1, lane_target // W)


def _vmem_cap_bytes():
    try:
        info = pltpu.get_tpu_info()
        cap = getattr(info, "vmem_capacity_bytes", None)
        if cap:
            return int(cap)
    except Exception:
        pass
    return 64 << 20  # conservative floor (v7x per-TensorCore VMEM)


def _bdiag(m, TN):
    r, c = m.shape
    out = np.zeros((TN * r, TN * c), dtype=m.dtype)
    for t in range(TN):
        out[t * r:(t + 1) * r, t * c:(t + 1) * c] = m
    return out


def _build_constants(H, W, TN):
    """DFT matrices: full H axis in fftshift order, Hermitian half W axis."""
    Wh = W // 2 + 1
    h = np.arange(H)
    w = np.arange(W)
    fH = np.fft.fftshift(np.arange(H))              # shifted position -> frequency bin
    angH = 2.0 * np.pi * np.outer(fH, h) / float(H)
    CH, SH = np.cos(angH), np.sin(angH)             # (H, H), rows in shifted order
    j = np.arange(Wh)                               # kept bins 0..W//2 (natural order)
    angW = 2.0 * np.pi * np.outer(j, w) / float(W)
    CWh, SWh = np.cos(angW), np.sin(angW)           # (Wh, W)

    f32 = np.float32
    CwF = _bdiag(CWh.T, TN).astype(f32)             # (TN*W,  TN*Wh) forward W stage
    SwF = _bdiag(SWh.T, TN).astype(f32)
    CwI = _bdiag(CWh, TN).astype(f32)               # (TN*Wh, TN*W)  inverse W stage
    SwI = _bdiag(SWh, TN).astype(f32)
    return (CwF, SwF, CH.astype(f32), SH.astype(f32), CwI, SwI,
            np.ascontiguousarray(CH.T).astype(f32),
            np.ascontiguousarray(SH.T).astype(f32))


def _build_mask(data_prompt, H, W, ps, pad, TN):
    """Hermitian-symmetrized prompt mask (exact: reference takes .real of the
    inverse FFT), with irfft doubling weights and 1/(H*W) folded in.
    Rows: fftshift order; cols: kept bins 0..W//2 per packed image."""
    Wh = W // 2 + 1
    dp = data_prompt[0, 0].astype(jnp.float32)
    # torch F.pad quirk (last-dim pad sizes listed first); square images only.
    P_shift = jnp.pad(dp, ((pad, W - pad - ps), (pad, H - pad - ps)),
                      constant_values=1.0)                         # (H, W) shifted coords
    fW = np.fft.fftshift(np.arange(W))
    invW = np.argsort(fW)                                          # bin -> shifted position
    cpos = invW[np.arange(Wh)]                                     # kept bin j
    cneg = invW[(-np.arange(Wh)) % W]                              # bin -j
    rneg = ((H - np.arange(H)) % H) if H % 2 == 0 else (H - 1 - np.arange(H))
    Pm = 0.5 * (P_shift[:, cpos] + P_shift[rneg][:, cneg])         # (H, Wh)
    d = np.full((Wh,), 2.0, np.float32)
    d[0] = 1.0
    if W % 2 == 0:
        d[W // 2] = 1.0
    Pm = Pm * jnp.asarray(d)[None, :] * (1.0 / float(H * W))
    return jnp.tile(Pm, (1, TN)).astype(jnp.float32)


def _make_prompt_kernel(H, NW, NWh, pad, ps, b0):
    f32 = jnp.float32

    def kernel(x_ref, cwf_ref, swf_ref, ch_ref, sh_ref,
               cwi_ref, swi_ref, cht_ref, sht_ref, pm_ref,
               out_ref, alow_ref):
        X = x_ref[0]                                                   # (H, NW)

        # ---- forward DFT: half-spectrum W stage, then shifted-order H stage
        T1 = jnp.dot(X, cwf_ref[...], preferred_element_type=f32)     # (H, NWh)
        T2 = jnp.dot(X, swf_ref[...], preferred_element_type=f32)     # (H, NWh)
        CHm = ch_ref[...]
        SHm = sh_ref[...]
        re = (jnp.dot(CHm, T1, preferred_element_type=f32)
              - jnp.dot(SHm, T2, preferred_element_type=f32))          # (H, NWh)
        im = -(jnp.dot(CHm, T2, preferred_element_type=f32)
               + jnp.dot(SHm, T1, preferred_element_type=f32))         # (H, NWh)

        # ---- |FFT| only on the two row bands feeding the low-freq crop
        ra = re[pad:pad + ps, :]
        ia = im[pad:pad + ps, :]
        rb = re[b0:b0 + ps, :]
        ib = im[b0:b0 + ps, :]
        rr = jnp.concatenate([ra, rb], axis=0)
        ii = jnp.concatenate([ia, ib], axis=0)
        alow_ref[0] = jnp.sqrt(rr * rr + ii * ii)                       # (2ps, NWh)

        # ---- prompt mask (Hermitian-symmetrized; doubling + 1/(H*W) folded in)
        pm = pm_ref[...]
        zr = re * pm
        zi = im * pm

        # ---- inverse real DFT: W stage back to full width, then H stage
        u = (jnp.dot(zr, cwi_ref[...], preferred_element_type=f32)
             - jnp.dot(zi, swi_ref[...], preferred_element_type=f32))  # (H, NW)
        v = (jnp.dot(zr, swi_ref[...], preferred_element_type=f32)
             + jnp.dot(zi, cwi_ref[...], preferred_element_type=f32))  # (H, NW)
        out_ref[0] = (jnp.dot(cht_ref[...], u, preferred_element_type=f32)
                      - jnp.dot(sht_ref[...], v, preferred_element_type=f32))

    return kernel


def prompt_forward(x, data_prompt, prompt_size, padding_size):
    """JAX/Pallas equivalent of Prompt.forward.  x: (B, C, H, W) float."""
    B, C, H, W = x.shape
    if H != W:
        # the torch module's F.pad argument order only works for square images
        raise NotImplementedError("Prompt assumes square images")
    N = B * C
    ps, pad = int(prompt_size), int(padding_size)
    Wh = W // 2 + 1

    # mirrored row band start for the Hermitian amp crop
    b0 = H - pad - ps + (1 if H % 2 == 0 else 0)
    if b0 < 0 or b0 + ps > H or pad < 0:
        raise NotImplementedError("unsupported prompt_size / padding_size")

    TN = _pick_tn(N, W)
    G = -(-N // TN)
    Npad = G * TN
    NW = TN * W
    NWh = TN * Wh

    CwF, SwF, CHm, SHm, CwI, SwI, CHt, SHt = _build_constants(H, W, TN)
    Pm = _build_mask(data_prompt, H, W, ps, pad, TN)

    # layout plumbing: (B,C,H,W) -> (G, H, TN*W), images packed along lanes
    xl = x.reshape(N, H, W).astype(jnp.float32)
    if Npad != N:
        xl = jnp.concatenate([xl, jnp.zeros((Npad - N, H, W), jnp.float32)], axis=0)
    xl = xl.reshape(G, TN, H, W).transpose(0, 2, 1, 3).reshape(G, H, NW)

    kernel = _make_prompt_kernel(H, NW, NWh, pad, ps, b0)

    # VMEM budget: single-buffered constants + double-buffered I/O blocks +
    # in-kernel intermediates; capped by the device's physical VMEM.
    const_elems = 4 * NW * NWh + 4 * H * H + H * NWh
    block_elems = 2 * (2 * H * NW) + 2 * (2 * ps * NWh)
    interm_elems = 6 * H * NWh + 3 * H * NW + 6 * ps * NWh
    need = int(4 * 1.4 * (const_elems + block_elems + interm_elems)) + (2 << 20)
    vmem_limit = int(min(max(need, 32 << 20), int(0.85 * _vmem_cap_bytes())))

    grid_spec = pltpu.PrefetchScalarGridSpec(
        num_scalar_prefetch=0,
        grid=(G,),
        in_specs=[pl.BlockSpec((1, H, NW), lambda g: (g, 0, 0))]       # x slab
                 + [pl.BlockSpec(memory_space=pltpu.MemorySpace.VMEM)  # resident constants
                    for _ in range(9)],
        out_specs=[
            pl.BlockSpec((1, H, NW), lambda g: (g, 0, 0)),        # src_in_trg slab
            pl.BlockSpec((1, 2 * ps, NWh), lambda g: (g, 0, 0)),  # amp row bands
        ],
    )

    out_slab, alow_slab = pl.pallas_call(
        kernel,
        out_shape=(
            jax.ShapeDtypeStruct((G, H, NW), jnp.float32),
            jax.ShapeDtypeStruct((G, 2 * ps, NWh), jnp.float32),
        ),
        grid_spec=grid_spec,
        compiler_params=pltpu.CompilerParams(
            dimension_semantics=("parallel",),
            vmem_limit_bytes=vmem_limit,
        ),
    )(xl, jnp.asarray(CwF), jnp.asarray(SwF), jnp.asarray(CHm), jnp.asarray(SHm),
      jnp.asarray(CwI), jnp.asarray(SwI), jnp.asarray(CHt), jnp.asarray(SHt), Pm)

    # unpack the lane-packed slabs
    src = (out_slab.reshape(G, H, TN, W).transpose(0, 2, 1, 3)
           .reshape(Npad, H, W)[:N].reshape(B, C, H, W))

    alow = (alow_slab.reshape(G, 2 * ps, TN, Wh).transpose(0, 2, 1, 3)
            .reshape(Npad, 2 * ps, Wh)[:N])
    amp_a = alow[:, :ps, :]          # shifted rows pad..pad+ps-1, bins 0..W//2
    amp_b = alow[:, ps:, :]          # Hermitian mirror row band
    fcs = np.arange(pad, pad + ps) - (W // 2)          # crop-column frequencies
    colidx = np.abs(fcs).astype(np.int32)
    from_a = amp_a[:, :, colidx]
    from_b = amp_b[:, ::-1, :][:, :, colidx]           # |F(-k1,-k2)| = |F(k1,k2)|
    amp_low = jnp.where(jnp.asarray(fcs < 0)[None, None, :], from_b, from_a)
    amp_low = amp_low.reshape(B, C, ps, ps)
    return src, amp_low


if __name__ == "__main__":
    key = jax.random.PRNGKey(0)
    B, C, H, W = 2, 4, 16, 16
    image_size = H
    prompt_alpha = 0.25
    prompt_size = int(image_size * prompt_alpha) if int(image_size * prompt_alpha) > 1 else 1  # 4
    padding_size = (image_size - prompt_size) // 2                                             # 6

    x = jax.random.normal(key, (B, C, H, W), dtype=jnp.float32)
    # Deterministic, non-trivial prompt parameter (module init uses ones).
    data_prompt = jnp.linspace(0.5, 1.5, prompt_size * prompt_size,
                               dtype=jnp.float32).reshape(1, 1, prompt_size, prompt_size)

    src, amp_low = prompt_forward(x, data_prompt, prompt_size, padding_size)
    jax.block_until_ready((src, amp_low))

    # Pure-JAX reference replicating the torch forward exactly.
    fft = jnp.fft.fft2(x, axes=(-2, -1))
    amp_r, pha_r = jnp.abs(fft), jnp.angle(fft)
    amp_s = jnp.fft.fftshift(amp_r, axes=(-2, -1))
    prompt_full = jnp.pad(
        data_prompt,
        ((0, 0), (0, 0),
         (padding_size, W - padding_size - prompt_size),
         (padding_size, H - padding_size - prompt_size)),
        constant_values=1.0)
    amp_ = jnp.fft.ifftshift(amp_s * prompt_full, axes=(-2, -1))
    amp_low_ref = amp_s[:, :, padding_size:padding_size + prompt_size,
                        padding_size:padding_size + prompt_size]
    src_ref = jnp.fft.ifft2(jnp.cos(pha_r) * amp_ + 1j * jnp.sin(pha_r) * amp_,
                            axes=(-2, -1)).real

    assert jnp.allclose(src, src_ref, atol=5e-3, rtol=5e-3), \
        float(jnp.max(jnp.abs(src - src_ref)))
    assert jnp.allclose(amp_low, amp_low_ref, atol=5e-3, rtol=5e-3), \
        float(jnp.max(jnp.abs(amp_low - amp_low_ref)))
    print("KERNEL_OK")
</pallas_src>

<mosaic_0001>
module attributes {stable_mosaic.version = 11 : i64} {
  func.func @kernel(%arg0: i32, %arg1: memref<1x16x128xf32, #tpu.memory_space<vmem>>, %arg2: memref<128x72xf32, #tpu.memory_space<vmem>>, %arg3: memref<128x72xf32, #tpu.memory_space<vmem>>, %arg4: memref<16x16xf32, #tpu.memory_space<vmem>>, %arg5: memref<16x16xf32, #tpu.memory_space<vmem>>, %arg6: memref<72x128xf32, #tpu.memory_space<vmem>>, %arg7: memref<72x128xf32, #tpu.memory_space<vmem>>, %arg8: memref<16x16xf32, #tpu.memory_space<vmem>>, %arg9: memref<16x16xf32, #tpu.memory_space<vmem>>, %arg10: memref<16x72xf32, #tpu.memory_space<vmem>>, %arg11: memref<1x16x128xf32, #tpu.memory_space<vmem>>, %arg12: memref<1x8x72xf32, #tpu.memory_space<vmem>>) attributes {dimension_semantics = [#tpu.dimension_semantics<parallel>], iteration_bounds = array<i64: 1>, scalar_prefetch = 0 : i64, scratch_operands = 0 : i64, tpu.core_type = #tpu.core_type<tc>, window_params = [{transform_indices = @transform_0, window_bounds = array<i64: 1, 16, 128>}, {pipeline_mode = #tpu.pipeline_mode<synchronous>, transform_indices = @transform_1, window_bounds = array<i64: 128, 72>}, {pipeline_mode = #tpu.pipeline_mode<synchronous>, transform_indices = @transform_2, window_bounds = array<i64: 128, 72>}, {pipeline_mode = #tpu.pipeline_mode<synchronous>, transform_indices = @transform_3, window_bounds = array<i64: 16, 16>}, {pipeline_mode = #tpu.pipeline_mode<synchronous>, transform_indices = @transform_4, window_bounds = array<i64: 16, 16>}, {pipeline_mode = #tpu.pipeline_mode<synchronous>, transform_indices = @transform_5, window_bounds = array<i64: 72, 128>}, {pipeline_mode = #tpu.pipeline_mode<synchronous>, transform_indices = @transform_6, window_bounds = array<i64: 72, 128>}, {pipeline_mode = #tpu.pipeline_mode<synchronous>, transform_indices = @transform_7, window_bounds = array<i64: 16, 16>}, {pipeline_mode = #tpu.pipeline_mode<synchronous>, transform_indices = @transform_8, window_bounds = array<i64: 16, 16>}, {pipeline_mode = #tpu.pipeline_mode<synchronous>, transform_indices = @transform_9, window_bounds = array<i64: 16, 72>}, {transform_indices = @transform_10, window_bounds = array<i64: 1, 16, 128>}, {transform_indices = @transform_11, window_bounds = array<i64: 1, 8, 72>}]} {
    %c0 = arith.constant 0 : index
    %c0_0 = arith.constant 0 : index
    %c0_1 = arith.constant 0 : index
    %0 = vector.load %arg1[%c0, %c0_0, %c0_1] : memref<1x16x128xf32, #tpu.memory_space<vmem>>, vector<1x16x128xf32>
    %1 = vector.shape_cast %0 : vector<1x16x128xf32> to vector<16x128xf32>
    %c0_2 = arith.constant 0 : index
    %c0_3 = arith.constant 0 : index
    %2 = vector.load %arg2[%c0_2, %c0_3] : memref<128x72xf32, #tpu.memory_space<vmem>>, vector<128x72xf32>
    %cst = arith.constant dense<0.000000e+00> : vector<16x72xf32>
    %3 = tpu.matmul %1, %2, %cst {dimension_numbers = #tpu.dot_dimension_numbers<[1], [0], [0], [1], [0, 0, 1, 1], [], []>} : vector<16x128xf32>, vector<128x72xf32>, vector<16x72xf32> -> vector<16x72xf32>
    %c0_4 = arith.constant 0 : index
    %c0_5 = arith.constant 0 : index
    %4 = vector.load %arg3[%c0_4, %c0_5] : memref<128x72xf32, #tpu.memory_space<vmem>>, vector<128x72xf32>
    %cst_6 = arith.constant dense<0.000000e+00> : vector<16x72xf32>
    %5 = tpu.matmul %1, %4, %cst_6 {dimension_numbers = #tpu.dot_dimension_numbers<[1], [0], [0], [1], [0, 0, 1, 1], [], []>} : vector<16x128xf32>, vector<128x72xf32>, vector<16x72xf32> -> vector<16x72xf32>
    %c0_7 = arith.constant 0 : index
    %c0_8 = arith.constant 0 : index
    %6 = vector.load %arg4[%c0_7, %c0_8] : memref<16x16xf32, #tpu.memory_space<vmem>>, vector<16x16xf32>
    %c0_9 = arith.constant 0 : index
    %c0_10 = arith.constant 0 : index
    %7 = vector.load %arg5[%c0_9, %c0_10] : memref<16x16xf32, #tpu.memory_space<vmem>>, vector<16x16xf32>
    %cst_11 = arith.constant dense<0.000000e+00> : vector<16x72xf32>
    %8 = tpu.matmul %6, %3, %cst_11 {dimension_numbers = #tpu.dot_dimension_numbers<[1], [0], [0], [1], [0, 0, 1, 1], [], []>} : vector<16x16xf32>, vector<16x72xf32>, vector<16x72xf32> -> vector<16x72xf32>
    %cst_12 = arith.constant dense<0.000000e+00> : vector<16x72xf32>
    %9 = tpu.matmul %7, %5, %cst_12 {dimension_numbers = #tpu.dot_dimension_numbers<[1], [0], [0], [1], [0, 0, 1, 1], [], []>} : vector<16x16xf32>, vector<16x72xf32>, vector<16x72xf32> -> vector<16x72xf32>
    %10 = arith.subf %8, %9 : vector<16x72xf32>
    %cst_13 = arith.constant dense<0.000000e+00> : vector<16x72xf32>
    %11 = tpu.matmul %6, %5, %cst_13 {dimension_numbers = #tpu.dot_dimension_numbers<[1], [0], [0], [1], [0, 0, 1, 1], [], []>} : vector<16x16xf32>, vector<16x72xf32>, vector<16x72xf32> -> vector<16x72xf32>
    %cst_14 = arith.constant dense<0.000000e+00> : vector<16x72xf32>
    %12 = tpu.matmul %7, %3, %cst_14 {dimension_numbers = #tpu.dot_dimension_numbers<[1], [0], [0], [1], [0, 0, 1, 1], [], []>} : vector<16x16xf32>, vector<16x72xf32>, vector<16x72xf32> -> vector<16x72xf32>
    %13 = arith.addf %11, %12 : vector<16x72xf32>
    %cst_15 = arith.constant 0.000000e+00 : f32
    %14 = vector.broadcast %cst_15 : f32 to vector<16x72xf32>
    %15 = arith.subf %14, %13 : vector<16x72xf32>
    %16 = vector.extract_strided_slice %10 {offsets = [6, 0], sizes = [4, 72], strides = [1, 1]} : vector<16x72xf32> to vector<4x72xf32>
    %17 = vector.extract_strided_slice %15 {offsets = [6, 0], sizes = [4, 72], strides = [1, 1]} : vector<16x72xf32> to vector<4x72xf32>
    %18 = vector.extract_strided_slice %10 {offsets = [7, 0], sizes = [4, 72], strides = [1, 1]} : vector<16x72xf32> to vector<4x72xf32>
    %19 = vector.extract_strided_slice %15 {offsets = [7, 0], sizes = [4, 72], strides = [1, 1]} : vector<16x72xf32> to vector<4x72xf32>
    %20 = tpu.concatenate %16, %18 in 0 : vector<4x72xf32>, vector<4x72xf32> -> vector<8x72xf32>
    %21 = tpu.concatenate %17, %19 in 0 : vector<4x72xf32>, vector<4x72xf32> -> vector<8x72xf32>
    %22 = arith.mulf %20, %20 : vector<8x72xf32>
    %23 = arith.mulf %21, %21 : vector<8x72xf32>
    %24 = arith.addf %22, %23 : vector<8x72xf32>
    %25 = math.sqrt %24 : vector<8x72xf32>
    %c0_16 = arith.constant 0 : index
    %c0_17 = arith.constant 0 : index
    %c0_18 = arith.constant 0 : index
    %26 = vector.load %arg12[%c0_16, %c0_17, %c0_18] : memref<1x8x72xf32, #tpu.memory_space<vmem>>, vector<1x8x72xf32>
    %27 = vector.shape_cast %26 : vector<1x8x72xf32> to vector<8x72xf32>
    %28 = vector.shape_cast %25 : vector<8x72xf32> to vector<1x8x72xf32>
    tpu.vector_store %arg12[%c0_16, %c0_17, %c0_18], %28 {strides = array<i32>} : memref<1x8x72xf32, #tpu.memory_space<vmem>>, vector<1x8x72xf32>,
    %c0_19 = arith.constant 0 : index
    %c0_20 = arith.constant 0 : index
    %29 = vector.load %arg10[%c0_19, %c0_20] : memref<16x72xf32, #tpu.memory_space<vmem>>, vector<16x72xf32>
    %30 = arith.mulf %10, %29 : vector<16x72xf32>
    %31 = arith.mulf %15, %29 : vector<16x72xf32>
    %c0_21 = arith.constant 0 : index
    %c0_22 = arith.constant 0 : index
    %32 = vector.load %arg6[%c0_21, %c0_22] : memref<72x128xf32, #tpu.memory_space<vmem>>, vector<72x128xf32>
    %cst_23 = arith.constant dense<0.000000e+00> : vector<16x128xf32>
    %33 = tpu.matmul %30, %32, %cst_23 {dimension_numbers = #tpu.dot_dimension_numbers<[1], [0], [0], [1], [0, 0, 1, 1], [], []>} : vector<16x72xf32>, vector<72x128xf32>, vector<16x128xf32> -> vector<16x128xf32>
    %c0_24 = arith.constant 0 : index
    %c0_25 = arith.constant 0 : index
    %34 = vector.load %arg7[%c0_24, %c0_25] : memref<72x128xf32, #tpu.memory_space<vmem>>, vector<72x128xf32>
    %cst_26 = arith.constant dense<0.000000e+00> : vector<16x128xf32>
    %35 = tpu.matmul %31, %34, %cst_26 {dimension_numbers = #tpu.dot_dimension_numbers<[1], [0], [0], [1], [0, 0, 1, 1], [], []>} : vector<16x72xf32>, vector<72x128xf32>, vector<16x128xf32> -> vector<16x128xf32>
    %36 = arith.subf %33, %35 : vector<16x128xf32>
    %c0_27 = arith.constant 0 : index
    %c0_28 = arith.constant 0 : index
    %37 = vector.load %arg7[%c0_27, %c0_28] : memref<72x128xf32, #tpu.memory_space<vmem>>, vector<72x128xf32>
    %cst_29 = arith.constant dense<0.000000e+00> : vector<16x128xf32>
    %38 = tpu.matmul %30, %37, %cst_29 {dimension_numbers = #tpu.dot_dimension_numbers<[1], [0], [0], [1], [0, 0, 1, 1], [], []>} : vector<16x72xf32>, vector<72x128xf32>, vector<16x128xf32> -> vector<16x128xf32>
    %c0_30 = arith.constant 0 : index
    %c0_31 = arith.constant 0 : index
    %39 = vector.load %arg6[%c0_30, %c0_31] : memref<72x128xf32, #tpu.memory_space<vmem>>, vector<72x128xf32>
    %cst_32 = arith.constant dense<0.000000e+00> : vector<16x128xf32>
    %40 = tpu.matmul %31, %39, %cst_32 {dimension_numbers = #tpu.dot_dimension_numbers<[1], [0], [0], [1], [0, 0, 1, 1], [], []>} : vector<16x72xf32>, vector<72x128xf32>, vector<16x128xf32> -> vector<16x128xf32>
    %41 = arith.addf %38, %40 : vector<16x128xf32>
    %c0_33 = arith.constant 0 : index
    %c0_34 = arith.constant 0 : index
    %42 = vector.load %arg8[%c0_33, %c0_34] : memref<16x16xf32, #tpu.memory_space<vmem>>, vector<16x16xf32>
    %cst_35 = arith.constant dense<0.000000e+00> : vector<16x128xf32>
    %43 = tpu.matmul %42, %36, %cst_35 {dimension_numbers = #tpu.dot_dimension_numbers<[1], [0], [0], [1], [0, 0, 1, 1], [], []>} : vector<16x16xf32>, vector<16x128xf32>, vector<16x128xf32> -> vector<16x128xf32>
    %c0_36 = arith.constant 0 : index
    %c0_37 = arith.constant 0 : index
    %44 = vector.load %arg9[%c0_36, %c0_37] : memref<16x16xf32, #tpu.memory_space<vmem>>, vector<16x16xf32>
    %cst_38 = arith.constant dense<0.000000e+00> : vector<16x128xf32>
    %45 = tpu.matmul %44, %41, %cst_38 {dimension_numbers = #tpu.dot_dimension_numbers<[1], [0], [0], [1], [0, 0, 1, 1], [], []>} : vector<16x16xf32>, vector<16x128xf32>, vector<16x128xf32> -> vector<16x128xf32>
    %46 = arith.subf %43, %45 : vector<16x128xf32>
    %c0_39 = arith.constant 0 : index
    %c0_40 = arith.constant 0 : index
    %c0_41 = arith.constant 0 : index
    %47 = vector.load %arg11[%c0_39, %c0_40, %c0_41] : memref<1x16x128xf32, #tpu.memory_space<vmem>>, vector<1x16x128xf32>
    %48 = vector.shape_cast %47 : vector<1x16x128xf32> to vector<16x128xf32>
    %49 = vector.shape_cast %46 : vector<16x128xf32> to vector<1x16x128xf32>
    tpu.vector_store %arg11[%c0_39, %c0_40, %c0_41], %49 {strides = array<i32>} : memref<1x16x128xf32, #tpu.memory_space<vmem>>, vector<1x16x128xf32>,
    return
  }
  func.func @transform_0(%arg0: i32) -> (i32, i32, i32) {
    %c0_i32 = arith.constant 0 : i32
    %c0_i32_0 = arith.constant 0 : i32
    %c0_i32_1 = arith.constant 0 : i32
    return %arg0, %c0_i32, %c0_i32_0 : i32, i32, i32
  }
  func.func @transform_1(%arg0: i32) -> (i32, i32) {
    %c0_i32 = arith.constant 0 : i32
    %c0_i32_0 = arith.constant 0 : i32
    %c0_i32_1 = arith.constant 0 : i32
    return %c0_i32, %c0_i32_0 : i32, i32
  }
  func.func @transform_2(%arg0: i32) -> (i32, i32) {
    %c0_i32 = arith.constant 0 : i32
    %c0_i32_0 = arith.constant 0 : i32
    %c0_i32_1 = arith.constant 0 : i32
    return %c0_i32, %c0_i32_0 : i32, i32
  }
  func.func @transform_3(%arg0: i32) -> (i32, i32) {
    %c0_i32 = arith.constant 0 : i32
    %c0_i32_0 = arith.constant 0 : i32
    %c0_i32_1 = arith.constant 0 : i32
    return %c0_i32, %c0_i32_0 : i32, i32
  }
  func.func @transform_4(%arg0: i32) -> (i32, i32) {
    %c0_i32 = arith.constant 0 : i32
    %c0_i32_0 = arith.constant 0 : i32
    %c0_i32_1 = arith.constant 0 : i32
    return %c0_i32, %c0_i32_0 : i32, i32
  }
  func.func @transform_5(%arg0: i32) -> (i32, i32) {
    %c0_i32 = arith.constant 0 : i32
    %c0_i32_0 = arith.constant 0 : i32
    %c0_i32_1 = arith.constant 0 : i32
    return %c0_i32, %c0_i32_0 : i32, i32
  }
  func.func @transform_6(%arg0: i32) -> (i32, i32) {
    %c0_i32 = arith.constant 0 : i32
    %c0_i32_0 = arith.constant 0 : i32
    %c0_i32_1 = arith.constant 0 : i32
    return %c0_i32, %c0_i32_0 : i32, i32
  }
  func.func @transform_7(%arg0: i32) -> (i32, i32) {
    %c0_i32 = arith.constant 0 : i32
    %c0_i32_0 = arith.constant 0 : i32
    %c0_i32_1 = arith.constant 0 : i32
    return %c0_i32, %c0_i32_0 : i32, i32
  }
  func.func @transform_8(%arg0: i32) -> (i32, i32) {
    %c0_i32 = arith.constant 0 : i32
    %c0_i32_0 = arith.constant 0 : i32
    %c0_i32_1 = arith.constant 0 : i32
    return %c0_i32, %c0_i32_0 : i32, i32
  }
  func.func @transform_9(%arg0: i32) -> (i32, i32) {
    %c0_i32 = arith.constant 0 : i32
    %c0_i32_0 = arith.constant 0 : i32
    %c0_i32_1 = arith.constant 0 : i32
    return %c0_i32, %c0_i32_0 : i32, i32
  }
  func.func @transform_10(%arg0: i32) -> (i32, i32, i32) {
    %c0_i32 = arith.constant 0 : i32
    %c0_i32_0 = arith.constant 0 : i32
    %c0_i32_1 = arith.constant 0 : i32
    return %arg0, %c0_i32, %c0_i32_0 : i32, i32, i32
  }
  func.func @transform_11(%arg0: i32) -> (i32, i32, i32) {
    %c0_i32 = arith.constant 0 : i32
    %c0_i32_0 = arith.constant 0 : i32
    %c0_i32_1 = arith.constant 0 : i32
    return %arg0, %c0_i32, %c0_i32_0 : i32, i32, i32
  }
}

</mosaic_0001>

<llo_original>
// kernel: tpu_custom_call.1
$region0: #{tpu_custom_call.1}
  #allocation0 [shape = 'u32[]', space=smem, size = 0x4, offset = 0x4, fixed_abs, tag = 'smem constant byte address 0x4 - core index']
  #allocation1 [shape = 'u32[72,128]{1,0:T(1,128)}', space=vmem, size = 0x9000, scoped, tag = 'internal scratch']
  %s0 = inlined_call_operand.vmem [shape: f32[1,16,128], index: 0, kind: input, shape index: {}]
  %s1 = inlined_call_operand.vmem [shape: f32[128,72], index: 1, kind: input, shape index: {}]
  %s2 = inlined_call_operand.vmem [shape: f32[128,72], index: 2, kind: input, shape index: {}]
  %s3 = inlined_call_operand.vmem [shape: f32[16,16], index: 3, kind: input, shape index: {}]
  %s4 = inlined_call_operand.vmem [shape: f32[16,16], index: 4, kind: input, shape index: {}]
  %s5 = inlined_call_operand.vmem [shape: f32[72,128], index: 5, kind: input, shape index: {}]
  %s6 = inlined_call_operand.vmem [shape: f32[72,128], index: 6, kind: input, shape index: {}]
  %s7 = inlined_call_operand.vmem [shape: f32[16,16], index: 7, kind: input, shape index: {}]
  %s8 = inlined_call_operand.vmem [shape: f32[16,16], index: 8, kind: input, shape index: {}]
  %s9 = inlined_call_operand.vmem [shape: f32[16,72], index: 9, kind: input, shape index: {}]
  %s10 = inlined_call_operand.hbm [shape: f32[1,16,128], index: 10, kind: output, shape index: {0}]
  %s11 = inlined_call_operand.hbm [shape: f32[1,8,72], index: 11, kind: output, shape index: {1}]
  %12 = xla_tuple %s10, %s11
  %s13 = sld [smem:[#allocation0]]
  $region58: #{tpu_custom_call.1} parent=0
    _
  %s15 = ssub.s32 1, %s13
  %s16 = scalar_select 0, %s15, %s13
  $region1: #{tpu_custom_call.1} parent=0
    #allocation2 [shape = 'u8[8192]{0}', space=vmem, size = 0x2000, scoped, tag = 'output window, operand 0, single buffered']
    #allocation3 [shape = 's32[1]{0}', space=sflag, size = 0x4, scoped, tag = 'scoped memory for tpu_custom_call.1']
    #allocation4 [shape = 'u8[4096]{0}', space=vmem, size = 0x1000, scoped, tag = 'output window, operand 1, single buffered']
    #allocation5 [shape = 's32[1]{0}', space=sflag, size = 0x4, scoped, tag = 'scoped memory for tpu_custom_call.1']
    %17 = vsyncpa [#allocation3], 0
    %18 = vsyncpa [#allocation5], 0
    // Predicated region
    $region2: #{tpu_custom_call.1} parent=1 // pred_check
      _
    $region3: #{tpu_custom_call.1} parent=1 // pred_check_branch
      %20 = sbr.rel (0) target = $region5
    $region4: #{tpu_custom_call.1} parent=1 // pred_region
      _
    $region5: #{tpu_custom_call.1} parent=1 // pred_fallthru
      _
    // Predicated region
    $region6: #{tpu_custom_call.1} parent=1 // pred_check
      _
    $region7: #{tpu_custom_call.1} parent=1 // pred_check_branch
      %22 = sbr.rel (0) target = $region9
    $region8: #{tpu_custom_call.1} parent=1 // pred_region
      _
    $region9: #{tpu_custom_call.1} parent=1 // pred_fallthru
      _
    // Predicated region
    $region10: #{tpu_custom_call.1} parent=1 // pred_check
      _
    $region11: #{tpu_custom_call.1} parent=1 // pred_check_branch
      %24 = sbr.rel (0) target = $region13
    $region12: #{tpu_custom_call.1} parent=1 // pred_region
      _
    $region13: #{tpu_custom_call.1} parent=1 // pred_fallthru
      _
    // Predicated region
    $region14: #{tpu_custom_call.1} parent=1 // pred_check
      _
    $region15: #{tpu_custom_call.1} parent=1 // pred_check_branch
      %26 = sbr.rel (0) target = $region17
    $region16: #{tpu_custom_call.1} parent=1 // pred_region
      _
    $region17: #{tpu_custom_call.1} parent=1 // pred_fallthru
      _
    // Predicated region
    $region18: #{tpu_custom_call.1} parent=1 // pred_check
      _
    $region19: #{tpu_custom_call.1} parent=1 // pred_check_branch
      %28 = sbr.rel (0) target = $region21
    $region20: #{tpu_custom_call.1} parent=1 // pred_region
      _
    $region21: #{tpu_custom_call.1} parent=1 // pred_fallthru
      _
    // Predicated region
    $region22: #{tpu_custom_call.1} parent=1 // pred_check
      _
    $region23: #{tpu_custom_call.1} parent=1 // pred_check_branch
      %30 = sbr.rel (0) target = $region25
    $region24: #{tpu_custom_call.1} parent=1 // pred_region
      _
    $region25: #{tpu_custom_call.1} parent=1 // pred_fallthru
      _
    // Predicated region
    $region26: #{tpu_custom_call.1} parent=1 // pred_check
      _
    $region27: #{tpu_custom_call.1} parent=1 // pred_check_branch
      %32 = sbr.rel (0) target = $region29
    $region28: #{tpu_custom_call.1} parent=1 // pred_region
      _
    $region29: #{tpu_custom_call.1} parent=1 // pred_fallthru
      _
    // Predicated region
    $region30: #{tpu_custom_call.1} parent=1 // pred_check
      _
    $region31: #{tpu_custom_call.1} parent=1 // pred_check_branch
      %34 = sbr.rel (0) target = $region33
    $region32: #{tpu_custom_call.1} parent=1 // pred_region
      _
    $region33: #{tpu_custom_call.1} parent=1 // pred_fallthru
      _
    // Predicated region
    $region34: #{tpu_custom_call.1} parent=1 // pred_check
      _
    $region35: #{tpu_custom_call.1} parent=1 // pred_check_branch
      %36 = sbr.rel (0) target = $region37
    $region36: #{tpu_custom_call.1} parent=1 // pred_region
      _
    $region37: #{tpu_custom_call.1} parent=1 // pred_fallthru
      _
    // Predicated region
    $region38: #{tpu_custom_call.1} parent=1 // pred_check
      _
    $region39: #{tpu_custom_call.1} parent=1 // pred_check_branch
      %38 = sbr.rel (0) target = $region41
    $region40: #{tpu_custom_call.1} parent=1 // pred_region
      _
    $region41: #{tpu_custom_call.1} parent=1 // pred_fallthru
      _
    %v39 = vld [vmem:[%s0] sm:$0xff]
    %v40 = vld [vmem:[%s0 + $0x8] sm:$0xff]
    %v41 = vld [vmem:[%s1] sm:$0xff]
    %v42 = vld [vmem:[%s1 + $0x8] sm:$0xff]
    %v43 = vld [vmem:[%s1 + $0x10] sm:$0xff]
    %v44 = vld [vmem:[%s1 + $0x18] sm:$0xff]
    %v45 = vld [vmem:[%s1 + $0x20] sm:$0xff]
    %v46 = vld [vmem:[%s1 + $0x28] sm:$0xff]
    %v47 = vld [vmem:[%s1 + $0x30] sm:$0xff]
    %v48 = vld [vmem:[%s1 + $0x38] sm:$0xff]
    %v49 = vld [vmem:[%s1 + $0x40] sm:$0xff]
    %v50 = vld [vmem:[%s1 + $0x48] sm:$0xff]
    %v51 = vld [vmem:[%s1 + $0x50] sm:$0xff]
    %v52 = vld [vmem:[%s1 + $0x58] sm:$0xff]
    %v53 = vld [vmem:[%s1 + $0x60] sm:$0xff]
    %v54 = vld [vmem:[%s1 + $0x68] sm:$0xff]
    %v55 = vld [vmem:[%s1 + $0x70] sm:$0xff]
    %v56 = vld [vmem:[%s1 + $0x78] sm:$0xff]
    %57 = vmatpush.msra.mxu0 %v56
    %58 = vmatpush.msra.mxu0 %v55
    %59 = vmatpush.msra.mxu0 %v54
    %60 = vmatpush.msra.mxu0 %v53
    %61 = vmatpush.msra.mxu0 %v52
    %62 = vmatpush.msra.mxu0 %v51
    %63 = vmatpush.msra.mxu0 %v50
    %64 = vmatpush.msra.mxu0 %v49
    %65 = vmatpush.msra.mxu0 %v48
    %66 = vmatpush.msra.mxu0 %v47
    %67 = vmatpush.msra.mxu0 %v46
    %68 = vmatpush.msra.mxu0 %v45
    %69 = vmatpush.msra.mxu0 %v44
    %70 = vmatpush.msra.mxu0 %v43
    %71 = vmatpush.msra.mxu0 %v42
    %72 = vmatpush.msra.mxu0 %v41
    %73 = vmatmul.f32.gmra.mxu0 %v39
    %v74 = vpop.f32.mrf.mxu0
    %v75 = vadd.f32 0.0, %v74
    %76 = vmatmul.f32.gmra.mxu0 %v40
    %v77 = vpop.f32.mrf.mxu0
    %v78 = vadd.f32 0.0, %v77
    %79 = vdwg.mxu0
    %v80 = vld [vmem:[%s2] sm:$0xff]
    %v81 = vld [vmem:[%s2 + $0x8] sm:$0xff]
    %v82 = vld [vmem:[%s2 + $0x10] sm:$0xff]
    %v83 = vld [vmem:[%s2 + $0x18] sm:$0xff]
    %v84 = vld [vmem:[%s2 + $0x20] sm:$0xff]
    %v85 = vld [vmem:[%s2 + $0x28] sm:$0xff]
    %v86 = vld [vmem:[%s2 + $0x30] sm:$0xff]
    %v87 = vld [vmem:[%s2 + $0x38] sm:$0xff]
    %v88 = vld [vmem:[%s2 + $0x40] sm:$0xff]
    %v89 = vld [vmem:[%s2 + $0x48] sm:$0xff]
    %v90 = vld [vmem:[%s2 + $0x50] sm:$0xff]
    %v91 = vld [vmem:[%s2 + $0x58] sm:$0xff]
    %v92 = vld [vmem:[%s2 + $0x60] sm:$0xff]
    %v93 = vld [vmem:[%s2 + $0x68] sm:$0xff]
    %v94 = vld [vmem:[%s2 + $0x70] sm:$0xff]
    %v95 = vld [vmem:[%s2 + $0x78] sm:$0xff]
    %96 = vmatpush.msra.mxu0 %v95
    %97 = vmatpush.msra.mxu0 %v94
    %98 = vmatpush.msra.mxu0 %v93
    %99 = vmatpush.msra.mxu0 %v92
    %100 = vmatpush.msra.mxu0 %v91
    %101 = vmatpush.msra.mxu0 %v90
    %102 = vmatpush.msra.mxu0 %v89
    %103 = vmatpush.msra.mxu0 %v88
    %104 = vmatpush.msra.mxu0 %v87
    %105 = vmatpush.msra.mxu0 %v86
    %106 = vmatpush.msra.mxu0 %v85
    %107 = vmatpush.msra.mxu0 %v84
    %108 = vmatpush.msra.mxu0 %v83
    %109 = vmatpush.msra.mxu0 %v82
    %110 = vmatpush.msra.mxu0 %v81
    %111 = vmatpush.msra.mxu0 %v80
    %112 = vmatmul.f32.gmra.mxu0 %v39
    %v113 = vpop.f32.mrf.mxu0
    %v114 = vadd.f32 0.0, %v113
    %115 = vmatmul.f32.gmra.mxu0 %v40
    %v116 = vpop.f32.mrf.mxu0
    %v117 = vadd.f32 0.0, %v116
    %118 = vdwg.mxu0
    %v119 = vld [vmem:[%s3] sm:$0xff]
    %v120 = vld [vmem:[%s3 + $0x8] sm:$0xff]
    %v121 = vld [vmem:[%s4] sm:$0xff]
    %v122 = vld [vmem:[%s4 + $0x8] sm:$0xff]
    %vm123 = vcmask 130048
    %v125 = vsel %vm123, %v119, 0
    %v128 = vsel %vm123, %v120, 0
    %130 = vmatpush.msra.mxu0 0.0
    %131 = vmatpush.msra.mxu0 0.0
    %132 = vmatpush.msra.mxu0 0.0
    %133 = vmatpush.msra.mxu0 0.0
    %134 = vmatpush.msra.mxu0 0.0
    %135 = vmatpush.msra.mxu0 0.0
    %136 = vmatpush.msra.mxu0 0.0
    %137 = vmatpush.msra.mxu0 0.0
    %138 = vmatpush.msra.mxu0 0.0
    %139 = vmatpush.msra.mxu0 0.0
    %140 = vmatpush.msra.mxu0 0.0
    %141 = vmatpush.msra.mxu0 0.0
    %142 = vmatpush.msra.mxu0 0.0
    %143 = vmatpush.msra.mxu0 0.0
    %144 = vmatpush.msra.mxu0 %v78
    %145 = vmatpush.msra.mxu0 %v75
    %146 = vmatmul.f32.gmra.mxu0 %v125
    %v147 = vpop.f32.mrf.mxu0
    %v148 = vadd.f32 0.0, %v147
    %149 = vmatmul.f32.gmra.mxu0 %v128
    %v150 = vpop.f32.mrf.mxu0
    %v151 = vadd.f32 0.0, %v150
    %152 = vdwg.mxu0
    %v154 = vsel %vm123, %v121, 0
    %v157 = vsel %vm123, %v122, 0
    %159 = vmatpush.msra.mxu0 0.0
    %160 = vmatpush.msra.mxu0 0.0
    %161 = vmatpush.msra.mxu0 0.0
    %162 = vmatpush.msra.mxu0 0.0
    %163 = vmatpush.msra.mxu0 0.0
    %164 = vmatpush.msra.mxu0 0.0
    %165 = vmatpush.msra.mxu0 0.0
    %166 = vmatpush.msra.mxu0 0.0
    %167 = vmatpush.msra.mxu0 0.0
    %168 = vmatpush.msra.mxu0 0.0
    %169 = vmatpush.msra.mxu0 0.0
    %170 = vmatpush.msra.mxu0 0.0
    %171 = vmatpush.msra.mxu0 0.0
    %172 = vmatpush.msra.mxu0 0.0
    %173 = vmatpush.msra.mxu0 %v117
    %174 = vmatpush.msra.mxu0 %v114
    %175 = vmatmul.f32.gmra.mxu0 %v154
    %v176 = vpop.f32.mrf.mxu0
    %v177 = vadd.f32 0.0, %v176
    %178 = vmatmul.f32.gmra.mxu0 %v157
    %v179 = vpop.f32.mrf.mxu0
    %v180 = vadd.f32 0.0, %v179
    %181 = vdwg.mxu0
    %v182 = vsub.f32 %v148, %v177
    %v183 = vsub.f32 %v151, %v180
    %184 = vmatpush.msra.mxu0 0.0
    %185 = vmatpush.msra.mxu0 0.0
    %186 = vmatpush.msra.mxu0 0.0
    %187 = vmatpush.msra.mxu0 0.0
    %188 = vmatpush.msra.mxu0 0.0
    %189 = vmatpush.msra.mxu0 0.0
    %190 = vmatpush.msra.mxu0 0.0
    %191 = vmatpush.msra.mxu0 0.0
    %192 = vmatpush.msra.mxu0 0.0
    %193 = vmatpush.msra.mxu0 0.0
    %194 = vmatpush.msra.mxu0 0.0
    %195 = vmatpush.msra.mxu0 0.0
    %196 = vmatpush.msra.mxu0 0.0
    %197 = vmatpush.msra.mxu0 0.0
    %198 = vmatpush.msra.mxu0 %v78
    %199 = vmatpush.msra.mxu0 %v75
    %200 = vmatmul.f32.gmra.mxu0 %v154
    %v201 = vpop.f32.mrf.mxu0
    %v202 = vadd.f32 0.0, %v201
    %203 = vmatmul.f32.gmra.mxu0 %v157
    %v204 = vpop.f32.mrf.mxu0
    %v205 = vadd.f32 0.0, %v204
    %206 = vdwg.mxu0
    %207 = vmatpush.msra.mxu0 0.0
    %208 = vmatpush.msra.mxu0 0.0
    %209 = vmatpush.msra.mxu0 0.0
    %210 = vmatpush.msra.mxu0 0.0
    %211 = vmatpush.msra.mxu0 0.0
    %212 = vmatpush.msra.mxu0 0.0
    %213 = vmatpush.msra.mxu0 0.0
    %214 = vmatpush.msra.mxu0 0.0
    %215 = vmatpush.msra.mxu0 0.0
    %216 = vmatpush.msra.mxu0 0.0
    %217 = vmatpush.msra.mxu0 0.0
    %218 = vmatpush.msra.mxu0 0.0
    %219 = vmatpush.msra.mxu0 0.0
    %220 = vmatpush.msra.mxu0 0.0
    %221 = vmatpush.msra.mxu0 %v117
    %222 = vmatpush.msra.mxu0 %v114
    %223 = vmatmul.f32.gmra.mxu0 %v125
    %v224 = vpop.f32.mrf.mxu0
    %v225 = vadd.f32 %v202, %v224
    %226 = vmatmul.f32.gmra.mxu0 %v128
    %v227 = vpop.f32.mrf.mxu0
    %v228 = vadd.f32 %v205, %v227
    %229 = vdwg.mxu0
    %v230 = vsub.f32 0.0, %v225
    %v231 = vsub.f32 0.0, %v228
    %vm234 = vcmask 1041408
    %v235 = vrot.slane %v182, 6
    %v236 = vrot.slane %v183, 6
    %v237 = vsel %vm234, %v235, %v236
    %vm239 = vcmask 1044480
    %v240 = vrot.slane %v182, 3
    %v241 = vrot.slane %v183, 3
    %v242 = vsel %vm239, %v240, %v241
    %vm244 = vcmask 1043456
    %v245 = vsel %vm244, %v237, %v242
    %v248 = vrot.slane %v230, 6
    %v249 = vrot.slane %v231, 6
    %v250 = vsel %vm234, %v248, %v249
    %v252 = vrot.slane %v230, 3
    %v253 = vrot.slane %v231, 3
    %v254 = vsel %vm239, %v252, %v253
    %v256 = vsel %vm244, %v250, %v254
    %v257 = vmul.f32 %v245, %v245
    %v258 = vmul.f32 %v256, %v256
    %v259 = vadd.f32 %v257, %v258
    %v260 = vrsqrt.pop %v259
    %v261 = vmul.f32 %v260, %v259
    %v262 = vmul.f32 %v261, %v260
    %v263 = vmul.f32 0.5, %v262
    %v264 = vsub.f32 1.5, %v263
    %v265 = vmul.f32 %v260, %v264
    %v266 = vmul.f32 %v259, %v265
    %vm267 = vcmp.eq.f32.partialorder %v259, inf
    %v268 = vsel %vm267, %v259, %v266
    %vm269 = vcmp.eq.f32.partialorder %v259, 0.0
    %v270 = vand.u32 %v259, 2147483648
    %v271 = vsel %vm269, %v270, %v268
    %vm272 = vcmask 588800
    %273 = vst.msk [vmem:[#allocation4] sm:$0xff] %vm272, %v271
    %v274 = vld [vmem:[%s9] sm:$0xff]
    %v275 = vld [vmem:[%s9 + $0x8] sm:$0xff]
    %v276 = vmul.f32 %v182, %v274
    %v277 = vmul.f32 %v183, %v275
    %v278 = vmul.f32 %v230, %v274
    %v279 = vmul.f32 %v231, %v275
    %v280 = vld [vmem:[%s5] sm:$0xff]
    %v281 = vld [vmem:[%s5 + $0x8] sm:$0xff]
    %v282 = vld [vmem:[%s5 + $0x10] sm:$0xff]
    %v283 = vld [vmem:[%s5 + $0x18] sm:$0xff]
    %v284 = vld [vmem:[%s5 + $0x20] sm:$0xff]
    %v285 = vld [vmem:[%s5 + $0x28] sm:$0xff]
    %v286 = vld [vmem:[%s5 + $0x30] sm:$0xff]
    %v287 = vld [vmem:[%s5 + $0x38] sm:$0xff]
    %v288 = vld [vmem:[%s5 + $0x40] sm:$0xff]
    %v290 = vsel %vm272, %v276, 0
    %v293 = vsel %vm272, %v277, 0
    %295 = vmatpush.msra.mxu0 0.0
    %296 = vmatpush.msra.mxu0 0.0
    %297 = vmatpush.msra.mxu0 0.0
    %298 = vmatpush.msra.mxu0 0.0
    %299 = vmatpush.msra.mxu0 0.0
    %300 = vmatpush.msra.mxu0 0.0
    %301 = vmatpush.msra.mxu0 0.0
    %302 = vmatpush.msra.mxu0 %v288
    %303 = vmatpush.msra.mxu0 %v287
    %304 = vmatpush.msra.mxu0 %v286
    %305 = vmatpush.msra.mxu0 %v285
    %306 = vmatpush.msra.mxu0 %v284
    %307 = vmatpush.msra.mxu0 %v283
    %308 = vmatpush.msra.mxu0 %v282
    %309 = vmatpush.msra.mxu0 %v281
    %310 = vmatpush.msra.mxu0 %v280
    %311 = vmatmul.f32.gmra.mxu0 %v290
    %v312 = vpop.f32.mrf.mxu0
    %v313 = vadd.f32 0.0, %v312
    %314 = vmatmul.f32.gmra.mxu0 %v293
    %v315 = vpop.f32.mrf.mxu0
    %v316 = vadd.f32 0.0, %v315
    %317 = vdwg.mxu0
    %v318 = vld [vmem:[%s6] sm:$0xff]
    %v319 = vld [vmem:[%s6 + $0x8] sm:$0xff]
    %v320 = vld [vmem:[%s6 + $0x10] sm:$0xff]
    %v321 = vld [vmem:[%s6 + $0x18] sm:$0xff]
    %v322 = vld [vmem:[%s6 + $0x20] sm:$0xff]
    %v323 = vld [vmem:[%s6 + $0x28] sm:$0xff]
    %v324 = vld [vmem:[%s6 + $0x30] sm:$0xff]
    %v325 = vld [vmem:[%s6 + $0x38] sm:$0xff]
    %v326 = vld [vmem:[%s6 + $0x40] sm:$0xff]
    %v328 = vsel %vm272, %v278, 0
    %v331 = vsel %vm272, %v279, 0
    %333 = vmatpush.msra.mxu0 0.0
    %334 = vmatpush.msra.mxu0 0.0
    %335 = vmatpush.msra.mxu0 0.0
    %336 = vmatpush.msra.mxu0 0.0
    %337 = vmatpush.msra.mxu0 0.0
    %338 = vmatpush.msra.mxu0 0.0
    %339 = vmatpush.msra.mxu0 0.0
    %340 = vmatpush.msra.mxu0 %v326
    %341 = vmatpush.msra.mxu0 %v325
    %342 = vmatpush.msra.mxu0 %v324
    %343 = vmatpush.msra.mxu0 %v323
    %344 = vmatpush.msra.mxu0 %v322
    %345 = vmatpush.msra.mxu0 %v321
    %346 = vmatpush.msra.mxu0 %v320
    %347 = vmatpush.msra.mxu0 %v319
    %348 = vmatpush.msra.mxu0 %v318
    %349 = vmatmul.f32.gmra.mxu0 %v328
    %v350 = vpop.f32.mrf.mxu0
    %v351 = vadd.f32 0.0, %v350
    %352 = vmatmul.f32.gmra.mxu0 %v331
    %v353 = vpop.f32.mrf.mxu0
    %v354 = vadd.f32 0.0, %v353
    %355 = vdwg.mxu0
    %v356 = vsub.f32 %v313, %v351
    %v357 = vsub.f32 %v316, %v354
    %358 = vmatpush.msra.mxu0 0.0
    %359 = vmatpush.msra.mxu0 0.0
    %360 = vmatpush.msra.mxu0 0.0
    %361 = vmatpush.msra.mxu0 0.0
    %362 = vmatpush.msra.mxu0 0.0
    %363 = vmatpush.msra.mxu0 0.0
    %364 = vmatpush.msra.mxu0 0.0
    %365 = vmatpush.msra.mxu0 %v288
    %366 = vmatpush.msra.mxu0 %v287
    %367 = vmatpush.msra.mxu0 %v286
    %368 = vmatpush.msra.mxu0 %v285
    %369 = vmatpush.msra.mxu0 %v284
    %370 = vmatpush.msra.mxu0 %v283
    %371 = vmatpush.msra.mxu0 %v282
    %372 = vmatpush.msra.mxu0 %v281
    %373 = vmatpush.msra.mxu0 %v280
    %374 = vmatmul.f32.gmra.mxu0 %v328
    %v375 = vpop.f32.mrf.mxu0
    %v376 = vadd.f32 0.0, %v375
    %377 = vmatmul.f32.gmra.mxu0 %v331
    %v378 = vpop.f32.mrf.mxu0
    %v379 = vadd.f32 0.0, %v378
    %380 = vdwg.mxu0
    %381 = vmatpush.msra.mxu0 0.0
    %382 = vmatpush.msra.mxu0 0.0
    %383 = vmatpush.msra.mxu0 0.0
    %384 = vmatpush.msra.mxu0 0.0
    %385 = vmatpush.msra.mxu0 0.0
    %386 = vmatpush.msra.mxu0 0.0
    %387 = vmatpush.msra.mxu0 0.0
    %388 = vmatpush.msra.mxu0 %v326
    %389 = vmatpush.msra.mxu0 %v325
    %390 = vmatpush.msra.mxu0 %v324
    %391 = vmatpush.msra.mxu0 %v323
    %392 = vmatpush.msra.mxu0 %v322
    %393 = vmatpush.msra.mxu0 %v321
    %394 = vmatpush.msra.mxu0 %v320
    %395 = vmatpush.msra.mxu0 %v319
    %396 = vmatpush.msra.mxu0 %v318
    %397 = vmatmul.f32.gmra.mxu0 %v290
    %v398 = vpop.f32.mrf.mxu0
    %v399 = vadd.f32 %v376, %v398
    %400 = vmatmul.f32.gmra.mxu0 %v293
    %v401 = vpop.f32.mrf.mxu0
    %v402 = vadd.f32 %v379, %v401
    %403 = vdwg.mxu0
    %v404 = vld [vmem:[%s7] sm:$0xff]
    %v405 = vld [vmem:[%s7 + $0x8] sm:$0xff]
    %v407 = vsel %vm123, %v404, 0
    %v410 = vsel %vm123, %v405, 0
    %412 = vmatpush.msra.mxu0 0.0
    %413 = vmatpush.msra.mxu0 0.0
    %414 = vmatpush.msra.mxu0 0.0
    %415 = vmatpush.msra.mxu0 0.0
    %416 = vmatpush.msra.mxu0 0.0
    %417 = vmatpush.msra.mxu0 0.0
    %418 = vmatpush.msra.mxu0 0.0
    %419 = vmatpush.msra.mxu0 0.0
    %420 = vmatpush.msra.mxu0 0.0
    %421 = vmatpush.msra.mxu0 0.0
    %422 = vmatpush.msra.mxu0 0.0
    %423 = vmatpush.msra.mxu0 0.0
    %424 = vmatpush.msra.mxu0 0.0
    %425 = vmatpush.msra.mxu0 0.0
    %426 = vmatpush.msra.mxu0 %v357
    %427 = vmatpush.msra.mxu0 %v356
    %428 = vmatmul.f32.gmra.mxu0 %v407
    %v429 = vpop.f32.mrf.mxu0
    %v430 = vadd.f32 0.0, %v429
    %431 = vmatmul.f32.gmra.mxu0 %v410
    %v432 = vpop.f32.mrf.mxu0
    %v433 = vadd.f32 0.0, %v432
    %434 = vdwg.mxu0
    %v435 = vld [vmem:[%s8] sm:$0xff]
    %v436 = vld [vmem:[%s8 + $0x8] sm:$0xff]
    %v438 = vsel %vm123, %v435, 0
    %v441 = vsel %vm123, %v436, 0
    %443 = vmatpush.msra.mxu0 0.0
    %444 = vmatpush.msra.mxu0 0.0
    %445 = vmatpush.msra.mxu0 0.0
    %446 = vmatpush.msra.mxu0 0.0
    %447 = vmatpush.msra.mxu0 0.0
    %448 = vmatpush.msra.mxu0 0.0
    %449 = vmatpush.msra.mxu0 0.0
    %450 = vmatpush.msra.mxu0 0.0
    %451 = vmatpush.msra.mxu0 0.0
    %452 = vmatpush.msra.mxu0 0.0
    %453 = vmatpush.msra.mxu0 0.0
    %454 = vmatpush.msra.mxu0 0.0
    %455 = vmatpush.msra.mxu0 0.0
    %456 = vmatpush.msra.mxu0 0.0
    %457 = vmatpush.msra.mxu0 %v402
    %458 = vmatpush.msra.mxu0 %v399
    %459 = vmatmul.f32.gmra.mxu0 %v438
    %v460 = vpop.f32.mrf.mxu0
    %v461 = vadd.f32 0.0, %v460
    %462 = vmatmul.f32.gmra.mxu0 %v441
    %v463 = vpop.f32.mrf.mxu0
    %v464 = vadd.f32 0.0, %v463
    %465 = vdwg.mxu0
    %v466 = vsub.f32 %v430, %v461
    %v467 = vsub.f32 %v433, %v464
    %468 = vst [vmem:[#allocation2] sm:$0xff] %v466
    %469 = vst [vmem:[#allocation2 + $0x8] sm:$0xff] %v467
    // Predicated region
    $region42: #{tpu_custom_call.1} parent=1 // pred_check
      _
    $region43: #{tpu_custom_call.1} parent=1 // pred_check_branch
      %471 = sbr.rel (0) target = $region45
    $region44: #{tpu_custom_call.1} parent=1 // pred_region
      %473 = vsyncadd [#allocation3], 0
      %s474 = sshll.u32 [#allocation2], 4
      %s475 = int_to_ptr.vmem [resolvable:$true] %s474
      %s476 = sshll.u32 %s10, 4
      %s477 = int_to_ptr.hbm [resolvable:$true] %s476
      %482 = dma.vmem_to_hbm [thread:$0]  %s475, 256, %s477, [#allocation3], 128, 128, 8
    $region45: #{tpu_custom_call.1} parent=1 // pred_fallthru
      _
    // Predicated region
    $region46: #{tpu_custom_call.1} parent=1 // pred_check
      _
    $region47: #{tpu_custom_call.1} parent=1 // pred_check_branch
      %484 = sbr.rel (0) target = $region49
    $region48: #{tpu_custom_call.1} parent=1 // pred_region
      %486 = vsyncadd [#allocation5], 0
      %s488 = sshll.u32 [#allocation4], 4
      %s489 = int_to_ptr.vmem [resolvable:$true] %s488
      %s490 = sshll.u32 %s11, 4
      %s491 = int_to_ptr.hbm [resolvable:$true] %s490
      %493 = dma.vmem_to_hbm [thread:$0]  %s489, 128, %s491, [#allocation5]
    $region49: #{tpu_custom_call.1} parent=1 // pred_fallthru
      _
    // Predicated region
    $region50: #{tpu_custom_call.1} parent=1 // pred_check
      _
    $region51: #{tpu_custom_call.1} parent=1 // pred_check_branch
      %495 = sbr.rel (0) target = $region53
    $region52: #{tpu_custom_call.1} parent=1 // pred_region
      %497 = dma.done [#allocation3], 256
    $region53: #{tpu_custom_call.1} parent=1 // pred_fallthru
      _
    // Predicated region
    $region54: #{tpu_custom_call.1} parent=1 // pred_check
      _
    $region55: #{tpu_custom_call.1} parent=1 // pred_check_branch
      %499 = sbr.rel (0) target = $region57
    $region56: #{tpu_custom_call.1} parent=1 // pred_region
      %501 = dma.done [#allocation5], 128
    $region57: #{tpu_custom_call.1} parent=1 // pred_fallthru
      _
    %502 = vsyncpa [#allocation3], 1
    %503 = vsyncpa [#allocation5], 1

</llo_original>
